<compile_context>
chip_gen: v7x
topology: tpu7x:2x2x1
jax: 0.10.0
libtpu: 0.0.40
codegen_flags: <defaults>
</compile_context>

<pallas_src>
import jax
import jax.numpy as jnp
from jax.experimental import pallas as pl
from jax.experimental.pallas import tpu as pltpu

HID = 10  # conv out-channels == LSTM input_size == LSTM hidden_size


def layer_gate_kernel(x_ref, wc_ref, w_ref, b_ref, o_ref, acc_ref):
    ci, hi = pl.program_id(1), pl.program_id(2)
    nc, nh = pl.num_programs(1), pl.num_programs(2)

    @pl.when(jnp.logical_and(ci == 0, hi == 0))
    def _init():
        acc_ref[...] = jnp.zeros_like(acc_ref)

    # Fused partial GAP + 1x1 conv for this (c, hw) tile.
    # wc already carries the 1/(H*W) mean scale, so a plain sum is enough; the
    # lane-axis reduction is VPU adds + one cross-lane XLU reduce per sublane group,
    # all hidden under the x-tile DMA (kernel is HBM-bandwidth bound).
    gap_t = jnp.sum(x_ref[...].astype(jnp.float32), axis=-1)            # (n_t, c_t)
    acc_ref[...] += jnp.dot(gap_t, wc_ref[...],
                            preferred_element_type=jnp.float32)          # (n_t, 10)

    @pl.when(jnp.logical_and(ci == nc - 1, hi == nh - 1))
    def _finalize():
        w = w_ref[...]                                                    # (10, 31) = [wi|wg|wo|wfc]
        b = b_ref[...]                                                    # (1, 41)  = [bc|bi|bg|bo|bfc]

        # conv bias + ReLU
        y = jnp.maximum(acc_ref[...] + b[:, 0:HID], 0.0)                  # (n_t, 10)

        # single-step LSTM (h0 = c0 = 0): one fused matmul for the live gates [i|g|o];
        # the forget gate is dead (f * c0 == 0) and the W_hh @ h0 term vanishes.
        g = jnp.dot(y, w[:, 0:3 * HID],
                    preferred_element_type=jnp.float32) + b[:, HID:4 * HID]
        gi = jax.nn.sigmoid(g[:, 0:HID])
        gg = jnp.tanh(g[:, HID:2 * HID])
        go = jax.nn.sigmoid(g[:, 2 * HID:3 * HID])
        h = go * jnp.tanh(gi * gg)                                        # (n_t, 10)

        # fc; then ReLU -> Sigmoid -> round  ==  1[z > 0]  (exact identity)
        z = jnp.dot(h, w[:, 3 * HID:3 * HID + 1],
                    preferred_element_type=jnp.float32) + b[:, 4 * HID:4 * HID + 1]
        o_ref[...] = (z > 0.0).astype(o_ref.dtype)                        # (n_t, 1) in {0., 1.}


def _largest_divisor(total, step, cap):
    """Largest multiple of `step` dividing `total` and <= cap (at least `step`)."""
    best = step
    d = step
    while d <= total:
        if total % d == 0 and d <= cap:
            best = d
        d += step
    return best


def _pick_tiles(N, C, HW, itemsize, target_bytes=2 << 20):
    """(n_tile, c_tile, hw_tile) for the x block: layout-legal divisors targeting
    ~2 MiB per buffer so double-buffering fits every generation's scoped VMEM."""
    n_tile = N if N % 8 else 8                     # keep n small -> megacore granularity
    hw_cap = max(128, target_bytes // (n_tile * 8 * itemsize))
    hw_tile = HW if HW % 128 else _largest_divisor(HW, 128, hw_cap)
    c_cap = max(8, target_bytes // (n_tile * hw_tile * itemsize))
    c_tile = C if C % 8 else _largest_divisor(C, 8, c_cap)
    return n_tile, c_tile, hw_tile


def layer_gate(x, params, *, tiles=None, interpret=False):
    """x: (N, C, H, W) float32/bfloat16 (NCHW, like PyTorch). Returns (N, 1) float32."""
    N, C, H, W = x.shape
    HW = H * W
    if x.dtype != jnp.float32 and x.dtype != jnp.bfloat16:
        x = x.astype(jnp.float32)
    # NOTE: passing bf16 activations halves HBM traffic on v6e/v7x; GAP accumulates in f32.
    x_flat = x.reshape(N, C, HW)

    f32 = jnp.float32
    # 1x1 conv weight (10, C, 1, 1) -> (C, 10), mean scale folded in.
    wc = (params["conv_w"].reshape(HID, C).T / float(HW)).astype(f32)       # (C, 10)

    # LSTM: PyTorch packs gates [i, f, g, o] along dim 0 of (4H, H). Drop f (c0 == 0).
    w_ih = params["lstm_w_ih"].astype(f32)                                  # (40, 10)
    b_g = (params["lstm_b_ih"] + params["lstm_b_hh"]).astype(f32)           # (40,)
    wi, wg, wo = (w_ih[k * HID:(k + 1) * HID].T for k in (0, 2, 3))         # (10, 10) each
    bi, bg, bo = (b_g[k * HID:(k + 1) * HID] for k in (0, 2, 3))            # (10,) each
    wfc = params["fc_w"].astype(f32).T                                      # (10, 1)
    bfc = params["fc_b"].astype(f32).reshape(1)                             # (1,)

    # Pack everything small into one weight slab and one bias slab (2 DMAs, not 12).
    w_slab = jnp.concatenate([wi, wg, wo, wfc], axis=1)                     # (10, 31)
    b_slab = jnp.concatenate(
        [params["conv_b"].astype(f32), bi, bg, bo, bfc])[None, :]           # (1, 41)

    if tiles is None:
        tiles = _pick_tiles(N, C, HW, x_flat.dtype.itemsize)
    n_t, c_t, hw_t = tiles
    assert N % n_t == 0 and C % c_t == 0 and HW % hw_t == 0
    grid = (N // n_t, C // c_t, HW // hw_t)

    # Double-buffered x tiles + small slabs + scratch, with headroom; cap at the
    # smallest physical VMEM across generations (64 MiB on v7x).
    x_tile_bytes = n_t * c_t * hw_t * x_flat.dtype.itemsize
    vmem_limit = int(min(64 << 20, max(8 << 20, 2 * x_tile_bytes + (4 << 20))))

    cost = pl.CostEstimate(
        flops=int(2.0 * N * C * HW + 2.0 * N * C * HID + 2.0 * N * HID * (3 * HID + 1)),
        transcendentals=int(N * 4 * HID),
        bytes_accessed=int(x_flat.size * x_flat.dtype.itemsize
                           + (wc.size + w_slab.size + b_slab.size) * 4 + N * 4),
    )

    return pl.pallas_call(
        layer_gate_kernel,
        out_shape=jax.ShapeDtypeStruct((N, 1), jnp.float32),
        grid_spec=pltpu.PrefetchScalarGridSpec(
            num_scalar_prefetch=0,
            grid=grid,
            in_specs=[
                pl.BlockSpec((n_t, c_t, hw_t), lambda n, c, h: (n, c, h)),   # x tiles (pipelined)
                pl.BlockSpec((c_t, HID), lambda n, c, h: (c, 0)),            # conv weight tile
                pl.BlockSpec((HID, 3 * HID + 1), lambda n, c, h: (0, 0)),    # fused weight slab
                pl.BlockSpec((1, 4 * HID + 1), lambda n, c, h: (0, 0)),      # fused bias slab
            ],
            out_specs=pl.BlockSpec((n_t, 1), lambda n, c, h: (n, 0)),
            scratch_shapes=[pltpu.VMEM((n_t, HID), jnp.float32)],
        ),
        compiler_params=pltpu.CompilerParams(
            dimension_semantics=("parallel", "arbitrary", "arbitrary"),
            vmem_limit_bytes=vmem_limit,
        ),
        cost_estimate=cost,
        interpret=interpret,
    )(x_flat, wc, w_slab, b_slab)


def layer_gate_ref(x, params):
    """Pure-JAX reference of the PyTorch LayerGate forward (seq_len = 1, h0 = c0 = 0)."""
    N, C = x.shape[:2]
    gap = jnp.mean(x.astype(jnp.float32), axis=(2, 3))                       # (N, C)
    y = jnp.maximum(gap @ params["conv_w"].reshape(HID, C).T + params["conv_b"], 0.0)
    g = y @ params["lstm_w_ih"].T + params["lstm_b_ih"] + params["lstm_b_hh"]
    gi = jax.nn.sigmoid(g[:, 0:HID])
    gg = jnp.tanh(g[:, 2 * HID:3 * HID])
    go = jax.nn.sigmoid(g[:, 3 * HID:4 * HID])
    h = go * jnp.tanh(gi * gg)                                               # f*c0 == 0
    z = h @ params["fc_w"].T + params["fc_b"]
    return jnp.round(jax.nn.sigmoid(jnp.maximum(z, 0.0)))


if __name__ == "__main__":
    key = jax.random.PRNGKey(0)
    ks = jax.random.split(key, 8)

    N, C, H, W = 2, 4, 16, 16
    x = jax.random.normal(ks[0], (N, C, H, W), jnp.float32)

    # Deterministic synthetic parameters (shapes from LayerGate.__init__).
    params = {
        "conv_w":    jax.random.normal(ks[1], (HID, C, 1, 1), jnp.float32) * 0.5,
        "conv_b":    jax.random.normal(ks[2], (HID,), jnp.float32) * 0.1,
        "lstm_w_ih": jax.random.normal(ks[3], (4 * HID, HID), jnp.float32) * 0.3,
        "lstm_w_hh": jax.random.normal(ks[4], (4 * HID, HID), jnp.float32) * 0.3,  # unused (h0 == 0)
        "lstm_b_ih": jax.random.normal(ks[5], (4 * HID,), jnp.float32) * 0.1,
        "lstm_b_hh": jax.random.normal(ks[6], (4 * HID,), jnp.float32) * 0.1,
        "fc_w":      jax.random.normal(ks[7], (1, HID), jnp.float32) * 0.3,
        "fc_b":      jnp.zeros((1,), jnp.float32),
    }

    # Force a 2-step HW grid so the accumulator init/accumulate/finalize path is exercised.
    out = layer_gate(x, params, tiles=(2, 4, 128))
    jax.block_until_ready(out)

    ref = layer_gate_ref(x, params)
    assert out.shape == (N, 1)
    assert bool(jnp.all((out == 0.0) | (out == 1.0)))
    assert bool(jnp.array_equal(out, ref))
    print("KERNEL_OK")
</pallas_src>

<mosaic_0001>
module attributes {stable_mosaic.version = 11 : i64} {
  func.func @layer_gate_kernel(%arg0: i32, %arg1: i32, %arg2: i32, %arg3: memref<2x4x128xf32, #tpu.memory_space<vmem>>, %arg4: memref<4x10xf32, #tpu.memory_space<vmem>>, %arg5: memref<10x31xf32, #tpu.memory_space<vmem>>, %arg6: memref<1x41xf32, #tpu.memory_space<vmem>>, %arg7: memref<2x1xf32, #tpu.memory_space<vmem>>, %arg8: memref<2x10xf32, #tpu.memory_space<vmem>>) attributes {dimension_semantics = [#tpu.dimension_semantics<parallel>, #tpu.dimension_semantics<arbitrary>, #tpu.dimension_semantics<arbitrary>], iteration_bounds = array<i64: 1, 1, 2>, scalar_prefetch = 0 : i64, scratch_operands = 1 : i64, tpu.core_type = #tpu.core_type<tc>, window_params = [{transform_indices = @transform_0, window_bounds = array<i64: 2, 4, 128>}, {transform_indices = @transform_1, window_bounds = array<i64: 4, 10>}, {pipeline_mode = #tpu.pipeline_mode<synchronous>, transform_indices = @transform_2, window_bounds = array<i64: 10, 31>}, {pipeline_mode = #tpu.pipeline_mode<synchronous>, transform_indices = @transform_3, window_bounds = array<i64: 1, 41>}, {transform_indices = @transform_4, window_bounds = array<i64: 2, 1>}]} {
    %c0_i32 = arith.constant 0 : i32
    %0 = arith.cmpi eq, %arg1, %c0_i32 : i32
    %c0_i32_0 = arith.constant 0 : i32
    %1 = arith.cmpi eq, %arg2, %c0_i32_0 : i32
    %2 = arith.andi %0, %1 : i1
    %3 = arith.extui %2 : i1 to i32
    %c0_i32_1 = arith.constant 0 : i32
    %4 = arith.cmpi ne, %3, %c0_i32_1 : i32
    scf.if %4 {
      %cst_13 = arith.constant 0.000000e+00 : f32
      %17 = vector.broadcast %cst_13 : f32 to vector<2x10xf32>
      %c0_14 = arith.constant 0 : index
      %c0_15 = arith.constant 0 : index
      %18 = vector.load %arg8[%c0_14, %c0_15] : memref<2x10xf32, #tpu.memory_space<vmem>>, vector<2x10xf32>
      tpu.vector_store %arg8[%c0_14, %c0_15], %17 {strides = array<i32>} : memref<2x10xf32, #tpu.memory_space<vmem>>, vector<2x10xf32>,
    } else {
    }
    %c0 = arith.constant 0 : index
    %c0_2 = arith.constant 0 : index
    %c0_3 = arith.constant 0 : index
    %5 = vector.load %arg3[%c0, %c0_2, %c0_3] : memref<2x4x128xf32, #tpu.memory_space<vmem>>, vector<2x4x128xf32>
    %cst = arith.constant dense<0.000000e+00> : vector<2x4xf32>
    %6 = vector.multi_reduction <add>, %5, %cst [2] : vector<2x4x128xf32> to vector<2x4xf32>
    %c0_4 = arith.constant 0 : index
    %c0_5 = arith.constant 0 : index
    %7 = vector.load %arg8[%c0_4, %c0_5] : memref<2x10xf32, #tpu.memory_space<vmem>>, vector<2x10xf32>
    %c0_6 = arith.constant 0 : index
    %c0_7 = arith.constant 0 : index
    %8 = vector.load %arg4[%c0_6, %c0_7] : memref<4x10xf32, #tpu.memory_space<vmem>>, vector<4x10xf32>
    %cst_8 = arith.constant dense<0.000000e+00> : vector<2x10xf32>
    %9 = tpu.matmul %6, %8, %cst_8 {dimension_numbers = #tpu.dot_dimension_numbers<[1], [0], [0], [1], [0, 0, 1, 1], [], []>} : vector<2x4xf32>, vector<4x10xf32>, vector<2x10xf32> -> vector<2x10xf32>
    %10 = arith.addf %7, %9 : vector<2x10xf32>
    %c0_9 = arith.constant 0 : index
    %c0_10 = arith.constant 0 : index
    %11 = vector.load %arg8[%c0_9, %c0_10] : memref<2x10xf32, #tpu.memory_space<vmem>>, vector<2x10xf32>
    tpu.vector_store %arg8[%c0_9, %c0_10], %10 {strides = array<i32>} : memref<2x10xf32, #tpu.memory_space<vmem>>, vector<2x10xf32>,
    %c0_i32_11 = arith.constant 0 : i32
    %12 = arith.cmpi eq, %arg1, %c0_i32_11 : i32
    %c1_i32 = arith.constant 1 : i32
    %13 = arith.cmpi eq, %arg2, %c1_i32 : i32
    %14 = arith.andi %12, %13 : i1
    %15 = arith.extui %14 : i1 to i32
    %c0_i32_12 = arith.constant 0 : i32
    %16 = arith.cmpi ne, %15, %c0_i32_12 : i32
    scf.if %16 {
      %c0_13 = arith.constant 0 : index
      %c0_14 = arith.constant 0 : index
      %17 = vector.load %arg5[%c0_13, %c0_14] : memref<10x31xf32, #tpu.memory_space<vmem>>, vector<10x31xf32>
      %c0_15 = arith.constant 0 : index
      %c0_16 = arith.constant 0 : index
      %18 = vector.load %arg6[%c0_15, %c0_16] : memref<1x41xf32, #tpu.memory_space<vmem>>, vector<1x41xf32>
      %c0_17 = arith.constant 0 : index
      %c0_18 = arith.constant 0 : index
      %19 = vector.load %arg8[%c0_17, %c0_18] : memref<2x10xf32, #tpu.memory_space<vmem>>, vector<2x10xf32>
      %20 = vector.extract_strided_slice %18 {offsets = [0, 0], sizes = [1, 10], strides = [1, 1]} : vector<1x41xf32> to vector<1x10xf32>
      %21 = vector.broadcast %20 : vector<1x10xf32> to vector<2x10xf32>
      %22 = arith.addf %19, %21 : vector<2x10xf32>
      %cst_19 = arith.constant 0.000000e+00 : f32
      %23 = vector.broadcast %cst_19 : f32 to vector<2x10xf32>
      %24 = arith.maximumf %22, %23 : vector<2x10xf32>
      %25 = vector.extract_strided_slice %17 {offsets = [0, 0], sizes = [10, 30], strides = [1, 1]} : vector<10x31xf32> to vector<10x30xf32>
      %cst_20 = arith.constant dense<0.000000e+00> : vector<2x30xf32>
      %26 = tpu.matmul %24, %25, %cst_20 {dimension_numbers = #tpu.dot_dimension_numbers<[1], [0], [0], [1], [0, 0, 1, 1], [], []>} : vector<2x10xf32>, vector<10x30xf32>, vector<2x30xf32> -> vector<2x30xf32>
      %27 = vector.extract_strided_slice %18 {offsets = [0, 10], sizes = [1, 30], strides = [1, 1]} : vector<1x41xf32> to vector<1x30xf32>
      %28 = vector.broadcast %27 : vector<1x30xf32> to vector<2x30xf32>
      %29 = arith.addf %26, %28 : vector<2x30xf32>
      %30 = vector.extract_strided_slice %29 {offsets = [0, 0], sizes = [2, 10], strides = [1, 1]} : vector<2x30xf32> to vector<2x10xf32>
      %31 = arith.negf %30 : vector<2x10xf32>
      %32 = math.exp %31 : vector<2x10xf32>
      %cst_21 = arith.constant 1.000000e+00 : f32
      %33 = vector.broadcast %cst_21 : f32 to vector<2x10xf32>
      %34 = arith.addf %33, %32 : vector<2x10xf32>
      %35 = arith.divf %33, %34 : vector<2x10xf32>
      %36 = vector.extract_strided_slice %29 {offsets = [0, 10], sizes = [2, 10], strides = [1, 1]} : vector<2x30xf32> to vector<2x10xf32>
      %37 = math.tanh %36 : vector<2x10xf32>
      %38 = vector.extract_strided_slice %29 {offsets = [0, 20], sizes = [2, 10], strides = [1, 1]} : vector<2x30xf32> to vector<2x10xf32>
      %39 = arith.negf %38 : vector<2x10xf32>
      %40 = math.exp %39 : vector<2x10xf32>
      %cst_22 = arith.constant 1.000000e+00 : f32
      %41 = vector.broadcast %cst_22 : f32 to vector<2x10xf32>
      %42 = arith.addf %41, %40 : vector<2x10xf32>
      %43 = arith.divf %41, %42 : vector<2x10xf32>
      %44 = arith.mulf %35, %37 : vector<2x10xf32>
      %45 = math.tanh %44 : vector<2x10xf32>
      %46 = arith.mulf %43, %45 : vector<2x10xf32>
      %47 = vector.extract_strided_slice %17 {offsets = [0, 30], sizes = [10, 1], strides = [1, 1]} : vector<10x31xf32> to vector<10x1xf32>
      %cst_23 = arith.constant dense<0.000000e+00> : vector<2x1xf32>
      %48 = tpu.matmul %46, %47, %cst_23 {dimension_numbers = #tpu.dot_dimension_numbers<[1], [0], [0], [1], [0, 0, 1, 1], [], []>} : vector<2x10xf32>, vector<10x1xf32>, vector<2x1xf32> -> vector<2x1xf32>
      %49 = vector.extract_strided_slice %18 {offsets = [0, 40], sizes = [1, 1], strides = [1, 1]} : vector<1x41xf32> to vector<1x1xf32>
      %50 = vector.broadcast %49 : vector<1x1xf32> to vector<2x1xf32>
      %51 = arith.addf %48, %50 : vector<2x1xf32>
      %cst_24 = arith.constant 0.000000e+00 : f32
      %52 = vector.broadcast %cst_24 : f32 to vector<2x1xf32>
      %53 = arith.cmpf ogt, %51, %52 : vector<2x1xf32>
      %54 = arith.extui %53 : vector<2x1xi1> to vector<2x1xi32>
      %55 = arith.sitofp %54 : vector<2x1xi32> to vector<2x1xf32>
      %c0_25 = arith.constant 0 : index
      %c0_26 = arith.constant 0 : index
      %56 = vector.load %arg7[%c0_25, %c0_26] : memref<2x1xf32, #tpu.memory_space<vmem>>, vector<2x1xf32>
      tpu.vector_store %arg7[%c0_25, %c0_26], %55 {strides = array<i32>} : memref<2x1xf32, #tpu.memory_space<vmem>>, vector<2x1xf32>,
    } else {
    }
    return
  }
  func.func @transform_0(%arg0: i32, %arg1: i32, %arg2: i32) -> (i32, i32, i32) {
    %c0_i32 = arith.constant 0 : i32
    return %arg0, %arg1, %arg2 : i32, i32, i32
  }
  func.func @transform_1(%arg0: i32, %arg1: i32, %arg2: i32) -> (i32, i32) {
    %c0_i32 = arith.constant 0 : i32
    %c0_i32_0 = arith.constant 0 : i32
    return %arg1, %c0_i32 : i32, i32
  }
  func.func @transform_2(%arg0: i32, %arg1: i32, %arg2: i32) -> (i32, i32) {
    %c0_i32 = arith.constant 0 : i32
    %c0_i32_0 = arith.constant 0 : i32
    %c0_i32_1 = arith.constant 0 : i32
    return %c0_i32, %c0_i32_0 : i32, i32
  }
  func.func @transform_3(%arg0: i32, %arg1: i32, %arg2: i32) -> (i32, i32) {
    %c0_i32 = arith.constant 0 : i32
    %c0_i32_0 = arith.constant 0 : i32
    %c0_i32_1 = arith.constant 0 : i32
    return %c0_i32, %c0_i32_0 : i32, i32
  }
  func.func @transform_4(%arg0: i32, %arg1: i32, %arg2: i32) -> (i32, i32) {
    %c0_i32 = arith.constant 0 : i32
    %c0_i32_0 = arith.constant 0 : i32
    return %arg0, %c0_i32 : i32, i32
  }
}

</mosaic_0001>

<llo_original>
// kernel: tpu_custom_call.1
$region0: #{tpu_custom_call.1}
  #allocation0 [shape = 'u32[]', space=smem, size = 0x4, offset = 0x4, fixed_abs, tag = 'smem constant byte address 0x4 - core index']
  #allocation1 [shape = 'u32[144,128]{1,0:T(1,128)}', space=vmem, size = 0x12000, scoped, tag = 'internal scratch']
  #allocation2 [shape = 'f32[2,10]{1,0:T(2,128)}', space=vmem, size = 0x400, scoped, tag = 'scratch operand']
  %s0 = inlined_call_operand.hbm [shape: f32[2,4,256], index: 0, kind: input, shape index: {}]
  %s1 = inlined_call_operand.hbm [shape: f32[4,10], index: 1, kind: input, shape index: {}]
  %s2 = inlined_call_operand.hbm [shape: f32[10,31], index: 2, kind: input, shape index: {}]
  %s3 = inlined_call_operand.vmem [shape: f32[1,41], index: 3, kind: input, shape index: {}]
  %s4 = inlined_call_operand.vmem [shape: f32[2,1], index: 4, kind: output, shape index: {}]
  %s5 = sld [smem:[#allocation0]]
  $region69: #{tpu_custom_call.1} parent=0
    _
  %s7 = ssub.s32 1, %s5
  %s8 = scalar_select 0, %s7, %s5
  $region1: #{tpu_custom_call.1} parent=0
    #allocation3 [shape = 'u8[8192]{0}', space=vmem, size = 0x2000, scoped, tag = 'input window, operand 0']
    #allocation4 [shape = 's32[2]{0}', space=sflag, size = 0x8, scoped, tag = 'scoped memory for tpu_custom_call.1']
    #allocation5 [shape = 'u8[2048]{0}', space=vmem, size = 0x800, scoped, tag = 'input window, operand 1, single buffered']
    #allocation6 [shape = 's32[1]{0}', space=sflag, size = 0x4, scoped, tag = 'scoped memory for tpu_custom_call.1']
    #allocation7 [shape = 'u8[8192]{0}', space=vmem, size = 0x2000, scoped, tag = 'input window, operand 2, single buffered']
    %9 = vsyncpa [#allocation4], 0
    %s10 = scalar_lea.sflag [#allocation4], 1
    %11 = vsyncpa %s10, 0
    %12 = vsyncpa [#allocation6], 0
    loop: start=0, step=1, limit=4
    $region2: #{tpu_custom_call.1} parent=1 // loop_pre_header
      _
    $region3: #{tpu_custom_call.1} parent=1 // loop_header
      %s14 = sphi 0, %s18
      %p15 = scmp.ge.s32.totalorder %s14, 4
      %s21 = sphi 0, %s40
      %s22 = sphi 0, %s36
      %s23 = sphi 0, %s32
      %s24 = sphi 0, %s21
      %s25 = sphi 0, %s22
      %s26 = sphi 0, %s23
      %s27 = sphi 0, %s24
      %s28 = sphi 0, %s25
      %s29 = sphi 0, %s26
      %s47 = sphi 0, %s49
      %s50 = sphi 0, %s47
      %s51 = sphi 0, %s50
      %s67 = sphi 0, %s51
      %s73 = sphi 0, %s75
      %s76 = sphi 0, %s73
      %s77 = sphi 0, %s76
      %s93 = sphi 0, %s77
      %s97 = sphi 0, %s97
      %s99 = sphi 0, %s97
      %s100 = sphi 0, %s99
      %s114 = sphi 0, %s100
      %s118 = sphi 0, %s118
      %s120 = sphi 0, %s118
      %s121 = sphi 0, %s120
      %s135 = sphi 0, %s121
      %s141 = sphi 0, %s143
      %s144 = sphi 0, %s141
      %s145 = sphi 0, %s144
      %s161 = sphi 0, %s145
    $region4: #{tpu_custom_call.1} parent=1 // loop_header_branch
      %17 = sbr.rel (%p15) target = $region8
    $region5: #{tpu_custom_call.1} parent=1 // loop_body
      %s19 = ssub.s32 %s14, 1
      %s20 = ssub.s32 %s14, 2
      %s30 = sadd.s32 1, %s23
      %p31 = scmp.ge.s32.totalorder %s30, 2
      %s32 = scalar_select %p31, 0, %s30
      %s33 = sadd.s32 1, %s22
      %s34 = scalar_select %p31, %s33, %s22
      %p35 = scmp.ge.s32.totalorder %s34, 1
      %s36 = scalar_select %p35, 0, %s34
      %s37 = sadd.s32 1, %s21
      %s38 = scalar_select %p35, %s37, %s21
      %p39 = scmp.ge.s32.totalorder %s38, 1
      %s40 = scalar_select %p39, 0, %s38
      %s41 = ssub.s32 %s21, %s40
      %s42 = ssub.s32 %s22, %s36
      %s43 = sor.u32 %s41, %s42
      %s44 = ssub.s32 %s23, %s32
      %s45 = sor.u32 %s43, %s44
      %p46 = scmp.eq.s32.totalorder %s45, 0
      %s48 = sadd.s32 %s47, 1
      %s49 = scalar_select %p46, %s47, %s48
      %p52 = pneg %p46
      %p53 = scmp.eq.s32.totalorder %s14, 1
      %p54 = por %p52, %p53
      %p55 = scmp.ne.s32.totalorder %s47, %s50
      %p56 = scmp.eq.s32.totalorder %s14, 0
      %p57 = por %p55, %p56
      %p58 = scmp.ne.s32.totalorder %s47, %s50
      %p59 = scmp.eq.s32.totalorder %s19, 1
      %p60 = por %p58, %p59
      %p61 = scmp.ne.s32.totalorder %s50, %s51
      %p62 = scmp.eq.s32.totalorder %s19, 0
      %p63 = por %p61, %p62
      %p64 = scmp.ne.s32.totalorder %s50, %s51
      %p65 = scmp.eq.s32.totalorder %s20, 1
      %p66 = por %p64, %p65
      %p68 = scmp.ne.s32.totalorder %s51, %s67
      %p69 = scmp.eq.s32.totalorder %s20, 0
      %p70 = por %p68, %p69
      %s71 = ssub.s32 %s22, %s36
      %p72 = scmp.eq.s32.totalorder %s71, 0
      %s74 = sadd.s32 %s73, 1
      %s75 = scalar_select %p72, %s73, %s74
      %p78 = pneg %p72
      %p79 = scmp.eq.s32.totalorder %s14, 1
      %p80 = por %p78, %p79
      %p81 = scmp.ne.s32.totalorder %s73, %s76
      %p82 = scmp.eq.s32.totalorder %s14, 0
      %p83 = por %p81, %p82
      %p84 = scmp.ne.s32.totalorder %s73, %s76
      %p85 = scmp.eq.s32.totalorder %s19, 1
      %p86 = por %p84, %p85
      %p87 = scmp.ne.s32.totalorder %s76, %s77
      %p88 = scmp.eq.s32.totalorder %s19, 0
      %p89 = por %p87, %p88
      %p90 = scmp.ne.s32.totalorder %s76, %s77
      %p91 = scmp.eq.s32.totalorder %s20, 1
      %p92 = por %p90, %p91
      %p94 = scmp.ne.s32.totalorder %s77, %s93
      %p95 = scmp.eq.s32.totalorder %s20, 0
      %p96 = por %p94, %p95
      %s98 = sadd.s32 %s97, 1
      %p101 = scmp.eq.s32.totalorder %s14, 1
      %p102 = scmp.ne.s32.totalorder %s97, %s99
      %p103 = scmp.eq.s32.totalorder %s14, 0
      %p104 = por %p102, %p103
      %p105 = scmp.ne.s32.totalorder %s97, %s99
      %p106 = scmp.eq.s32.totalorder %s19, 1
      %p107 = por %p105, %p106
      %p108 = scmp.ne.s32.totalorder %s99, %s100
      %p109 = scmp.eq.s32.totalorder %s19, 0
      %p110 = por %p108, %p109
      %p111 = scmp.ne.s32.totalorder %s99, %s100
      %p112 = scmp.eq.s32.totalorder %s20, 1
      %p113 = por %p111, %p112
      %p115 = scmp.ne.s32.totalorder %s100, %s114
      %p116 = scmp.eq.s32.totalorder %s20, 0
      %p117 = por %p115, %p116
      %s119 = sadd.s32 %s118, 1
      %p122 = scmp.eq.s32.totalorder %s14, 1
      %p123 = scmp.ne.s32.totalorder %s118, %s120
      %p124 = scmp.eq.s32.totalorder %s14, 0
      %p125 = por %p123, %p124
      %p126 = scmp.ne.s32.totalorder %s118, %s120
      %p127 = scmp.eq.s32.totalorder %s19, 1
      %p128 = por %p126, %p127
      %p129 = scmp.ne.s32.totalorder %s120, %s121
      %p130 = scmp.eq.s32.totalorder %s19, 0
      %p131 = por %p129, %p130
      %p132 = scmp.ne.s32.totalorder %s120, %s121
      %p133 = scmp.eq.s32.totalorder %s20, 1
      %p134 = por %p132, %p133
      %p136 = scmp.ne.s32.totalorder %s121, %s135
      %p137 = scmp.eq.s32.totalorder %s20, 0
      %p138 = por %p136, %p137
      %s139 = ssub.s32 %s21, %s40
      %p140 = scmp.eq.s32.totalorder %s139, 0
      %s142 = sadd.s32 %s141, 1
      %s143 = scalar_select %p140, %s141, %s142
      %p146 = pneg %p140
      %p147 = scmp.eq.s32.totalorder %s14, 1
      %p148 = por %p146, %p147
      %p149 = scmp.ne.s32.totalorder %s141, %s144
      %p150 = scmp.eq.s32.totalorder %s14, 0
      %p151 = por %p149, %p150
      %p152 = scmp.ne.s32.totalorder %s141, %s144
      %p153 = scmp.eq.s32.totalorder %s19, 1
      %p154 = por %p152, %p153
      %p155 = scmp.ne.s32.totalorder %s144, %s145
      %p156 = scmp.eq.s32.totalorder %s19, 0
      %p157 = por %p155, %p156
      %p158 = scmp.ne.s32.totalorder %s144, %s145
      %p159 = scmp.eq.s32.totalorder %s20, 1
      %p160 = por %p158, %p159
      %p162 = scmp.ne.s32.totalorder %s145, %s161
      %p163 = scmp.eq.s32.totalorder %s20, 0
      %p164 = por %p162, %p163
      %p165 = scmp.le.s32.totalorder 1, %s14
      %p166 = scmp.lt.s32.totalorder %s14, 3
      %p167 = pnand %p165, %p166
      %p168 = pneg %p167
      // Predicated region
      $region9: #{tpu_custom_call.1} parent=5 // pred_check
        _
      $region10: #{tpu_custom_call.1} parent=5 // pred_check_branch
        %170 = sbr.rel (%p167) target = $region12
      $region11: #{tpu_custom_call.1} parent=5 // pred_region
        %s171 = ssub.s32 %s14, 1
        // Predicated region
        $region13: #{tpu_custom_call.1} parent=11 // pred_check
          %p172 = pneg %p89
        $region14: #{tpu_custom_call.1} parent=11 // pred_check_branch
          %174 = sbr.rel (%p172) target = $region16
        $region15: #{tpu_custom_call.1} parent=11 // pred_region
          %s176 = ssub.s32 64, 64
          %177 = vsyncadd [#allocation6], %s176
          %s178 = smul.addr %s25, 64
          %s179 = scalar_lea.hbm %s1, %s178
          %s181 = sshll.u32 [#allocation5], 4
          %s182 = int_to_ptr.vmem [resolvable:$true] %s181
          %184 = dma.hbm_to_vmem [thread:$0]  %s179, 64, %s182, [#allocation6]
        $region16: #{tpu_custom_call.1} parent=11 // pred_fallthru
          _
        // Predicated region
        $region17: #{tpu_custom_call.1} parent=11 // pred_check
          %p185 = pneg %p110
        $region18: #{tpu_custom_call.1} parent=11 // pred_check_branch
          %187 = sbr.rel (%p185) target = $region20
        $region19: #{tpu_custom_call.1} parent=11 // pred_region
          %s189 = ssub.s32 256, 256
          %190 = vsyncadd [#allocation6], %s189
          %s191 = sshll.u32 [#allocation7], 4
          %s192 = int_to_ptr.vmem [resolvable:$true] %s191
          %197 = dma.hbm_to_vmem [thread:$0]  %s2, 256, %s192, [#allocation6], 128, 128, 8
        $region20: #{tpu_custom_call.1} parent=11 // pred_fallthru
          _
        // Predicated region
        $region21: #{tpu_custom_call.1} parent=11 // pred_check
          %p198 = pneg %p131
        $region22: #{tpu_custom_call.1} parent=11 // pred_check_branch
          %200 = sbr.rel (%p198) target = $region24
        $region23: #{tpu_custom_call.1} parent=11 // pred_region
          _
        $region24: #{tpu_custom_call.1} parent=11 // pred_fallthru
          _
      $region12: #{tpu_custom_call.1} parent=5 // pred_fallthru
        _
      %p201 = scmp.lt.s32.totalorder %s14, 2
      // Predicated region
      $region25: #{tpu_custom_call.1} parent=5 // pred_check
        %p202 = pneg %p201
      $region26: #{tpu_custom_call.1} parent=5 // pred_check_branch
        %204 = sbr.rel (%p202) target = $region28
      $region27: #{tpu_custom_call.1} parent=5 // pred_region
        // Predicated region
        $region29: #{tpu_custom_call.1} parent=27 // pred_check
          %p205 = pneg %p57
        $region30: #{tpu_custom_call.1} parent=27 // pred_check_branch
          %207 = sbr.rel (%p205) target = $region32
        $region31: #{tpu_custom_call.1} parent=27 // pred_region
          %s208 = sand.u32 %s47, 1
          %s209 = scalar_lea.sflag [#allocation4], %s208
          %s210 = sand.u32 %s47, 1
          %s211 = smul.addr %s210, 8
          %s212 = scalar_lea.vmem [#allocation3], %s211
          %s213 = smul.u32 2, %s21
          %s215 = ssub.s32 128, 128
          %216 = vsyncadd %s209, %s215
          %s217 = smul.addr %s22, 2
          %s218 = sadd.s32 %s23, %s217
          %s219 = smul.addr %s213, 2
          %s220 = sadd.s32 %s218, %s219
          %s221 = smul.addr %s220, 64
          %s222 = scalar_lea.hbm %s0, %s221
          %s223 = sshll.u32 %s212, 4
          %s224 = int_to_ptr.vmem [resolvable:$true] %s223
          %229 = dma.hbm_to_vmem [thread:$0]  %s222, 128, %s224, %s209, 128, 64, 4
        $region32: #{tpu_custom_call.1} parent=27 // pred_fallthru
          _
      $region28: #{tpu_custom_call.1} parent=5 // pred_fallthru
        _
      %p230 = scmp.le.s32.totalorder 1, %s14
      %p231 = scmp.lt.s32.totalorder %s14, 3
      %p232 = pnand %p230, %p231
      %p233 = pneg %p232
      // Predicated region
      $region33: #{tpu_custom_call.1} parent=5 // pred_check
        _
      $region34: #{tpu_custom_call.1} parent=5 // pred_check_branch
        %235 = sbr.rel (%p232) target = $region36
      $region35: #{tpu_custom_call.1} parent=5 // pred_region
        %s236 = ssub.s32 %s14, 1
        %s237 = sand.u32 %s50, 1
        %s238 = scalar_lea.sflag [#allocation4], %s237
        %s239 = sand.u32 %s50, 1
        %s240 = smul.addr %s239, 8
        %s241 = scalar_lea.vmem [#allocation3], %s240
        // Predicated region
        $region37: #{tpu_custom_call.1} parent=35 // pred_check
          %p242 = pneg %p63
        $region38: #{tpu_custom_call.1} parent=35 // pred_check_branch
          %244 = sbr.rel (%p242) target = $region40
        $region39: #{tpu_custom_call.1} parent=35 // pred_region
          %245 = dma.done %s238, 128
        $region40: #{tpu_custom_call.1} parent=35 // pred_fallthru
          _
        // Predicated region
        $region41: #{tpu_custom_call.1} parent=35 // pred_check
          %p246 = pneg %p89
        $region42: #{tpu_custom_call.1} parent=35 // pred_check_branch
          %248 = sbr.rel (%p246) target = $region44
        $region43: #{tpu_custom_call.1} parent=35 // pred_region
          %249 = dma.done [#allocation6], 64
        $region44: #{tpu_custom_call.1} parent=35 // pred_fallthru
          _
        // Predicated region
        $region45: #{tpu_custom_call.1} parent=35 // pred_check
          %p250 = pneg %p110
        $region46: #{tpu_custom_call.1} parent=35 // pred_check_branch
          %252 = sbr.rel (%p250) target = $region48
        $region47: #{tpu_custom_call.1} parent=35 // pred_region
          %253 = dma.done [#allocation6], 256
        $region48: #{tpu_custom_call.1} parent=35 // pred_fallthru
          _
        %s254 = sand.u32 %s50, 1
        %s255 = scalar_lea.sflag [#allocation4], %s254
        %s256 = sand.u32 %s50, 1
        %s257 = smul.addr %s256, 8
        %s258 = scalar_lea.vmem [#allocation3], %s257
        %p259 = pneg %p63
        %p260 = pneg %p60
        %p261 = pneg %p89
        %p262 = pneg %p86
        %p263 = pneg %p110
        %p264 = pneg %p107
        %p265 = pneg %p131
        %p266 = pneg %p128
        %p267 = pneg %p157
        %p268 = pneg %p154
        %p269 = scmp.lt.s32.totalorder %s24, 0
        %s270 = scalar_select %p269, %s24, 0
        %s271 = smul.addr %s270, 2
        %s272 = scalar_lea.vmem %s4, %s271
        %s273 = smul.u32 2, %s24
        %p274 = scmp.lt.s32.totalorder %s24, 0
        %s275 = scalar_select %p274, %s24, 0
        %s276 = smul.addr %s275, 2
        %s277 = scalar_lea.vmem %s4, %s276
        %p278 = scmp.eq.s32.totalorder %s25, 0
        %p279 = scmp.eq.s32.totalorder %s26, 0
        %p280 = pnand %p278, %p279
        %p281 = pneg %p280
        // Predicated region
        $region49: #{tpu_custom_call.1} parent=35 // pred_check
          _
        $region50: #{tpu_custom_call.1} parent=35 // pred_check_branch
          %283 = sbr.rel (%p280) target = $region52
        $region51: #{tpu_custom_call.1} parent=35 // pred_region
          %vm284 = vcmask 74752
          %285 = vst.msk [vmem:[#allocation2] sm:$0x3] %vm284, 0.0
        $region52: #{tpu_custom_call.1} parent=35 // pred_fallthru
          _
        %v286 = vld [vmem:[%s241] sm:$0xf]
        %v287 = vld [vmem:[%s241 + $0x4] sm:$0xf]
        %vm288 = vcmask 1043456
        %v289 = vsel %vm288, %v286, 0.0
        %290 = vadd.xlane.f32.xlu0 %v289
        %v291 = vpop.xlane.xlu0 %290
        %v292 = vsel %vm288, %v287, 0.0
        %293 = vadd.xlane.f32.xlu0 %v292
        %v294 = vpop.xlane.xlu0 %293
        %v295 = vld [vmem:[#allocation2] sm:$0x3]
        %v296 = vld [vmem:[#allocation5] sm:$0xf]
        %v299 = vlaneseq
        %v300 = vand.u32 %v299, 127
        %v301 = vlaneseq
        %v302 = vshrl.u32 %v301, 7
        %v303 = vsub.s32 %v300, %v302
        %v304 = vrot.slane %v291, %v303
        %v305 = vlaneseq
        %v306 = vshrl.u32 %v305, 7
        %v307 = vsub.s32 %v300, %v306
        %v308 = vrot.slane %v294, %v307
        %vm309 = vcmask 1041409
        %v310 = vsel %vm309, %v308, %v304
        %vm311 = vcmask 31744
        %v312 = vsel %vm311, %v310, 0
        %v315 = vsel %vm288, %v296, 0
        %317 = vmatprep.subr.mxu0 0.0
        %318 = vmatpush1.msra.mxu0 %v315
        %319 = vmatprep.subr.mxu0 0.0
        %320 = vmatpush1.msra.mxu0 0.0
        %321 = vmatprep.subr.mxu0 0.0
        %322 = vmatpush1.msra.mxu0 0.0
        %323 = vmatprep.subr.mxu0 0.0
        %324 = vmatpush1.msra.mxu0 0.0
        %325 = vmatprep.subr.mxu0 0.0
        %326 = vmatpush1.msra.mxu0 0.0
        %327 = vmatprep.subr.mxu0 0.0
        %328 = vmatpush1.msra.mxu0 0.0
        %329 = vmatprep.subr.mxu0 0.0
        %330 = vmatpush1.msra.mxu0 0.0
        %331 = vmatprep.subr.mxu0 0.0
        %332 = vmatpush1.msra.mxu0 0.0
        %333 = vmatprep.subr.mxu0 0.0
        %334 = vmatpush1.msra.mxu0 0.0
        %335 = vmatprep.subr.mxu0 0.0
        %336 = vmatpush1.msra.mxu0 0.0
        %337 = vmatprep.subr.mxu0 0.0
        %338 = vmatpush1.msra.mxu0 0.0
        %339 = vmatprep.subr.mxu0 0.0
        %340 = vmatpush1.msra.mxu0 0.0
        %341 = vmatprep.subr.mxu0 0.0
        %342 = vmatpush1.msra.mxu0 0.0
        %343 = vmatprep.subr.mxu0 0.0
        %344 = vmatpush1.msra.mxu0 0.0
        %345 = vmatprep.subr.mxu0 0.0
        %346 = vmatpush1.msra.mxu0 0.0
        %347 = vmatprep.subr.mxu0 0.0
        %348 = vmatpush1.msra.mxu0 0.0
        %349 = vmatprep.subr.mxu0 0.0
        %350 = vmatpush1.msra.mxu0 0.0
        %351 = vmatprep.subr.mxu0 0.0
        %352 = vmatpush1.msra.mxu0 0.0
        %353 = vmatprep.subr.mxu0 0.0
        %354 = vmatpush1.msra.mxu0 0.0
        %355 = vmatprep.subr.mxu0 0.0
        %356 = vmatpush1.msra.mxu0 0.0
        %357 = vmatprep.subr.mxu0 0.0
        %358 = vmatpush1.msra.mxu0 0.0
        %359 = vmatprep.subr.mxu0 0.0
        %360 = vmatpush1.msra.mxu0 0.0
        %361 = vmatprep.subr.mxu0 0.0
        %362 = vmatpush1.msra.mxu0 0.0
        %363 = vmatprep.subr.mxu0 0.0
        %364 = vmatpush1.msra.mxu0 0.0
        %365 = vmatprep.subr.mxu0 0.0
        %366 = vmatpush1.msra.mxu0 0.0
        %367 = vmatprep.subr.mxu0 0.0
        %368 = vmatpush1.msra.mxu0 0.0
        %369 = vmatprep.subr.mxu0 0.0
        %370 = vmatpush1.msra.mxu0 0.0
        %371 = vmatprep.subr.mxu0 0.0
        %372 = vmatpush1.msra.mxu0 0.0
        %373 = vmatprep.subr.mxu0 0.0
        %374 = vmatpush1.msra.mxu0 0.0
        %375 = vmatprep.subr.mxu0 0.0
        %376 = vmatpush1.msra.mxu0 0.0
        %377 = vmatprep.subr.mxu0 0.0
        %378 = vmatpush1.msra.mxu0 0.0
        %379 = vmatprep.subr.mxu0 0.0
        %380 = vmatpush1.msra.mxu0 0.0
        %381 = vmatprep.mubr.f32.mxu0 0.0
        %382 = vmatmul.mubr.f32.gmra.mrb[0].mxu0 %v312
        %v383 = vpop.f32.mrb[0].mxu0
        %v384 = vadd.f32 0.0, %v383
        %v385 = vpop.f32.mrb[0].mxu0
        %386 = vdwg.mxu0
        %v387 = vadd.f32 %v295, %v384
        %vm388 = vcmask 74752
        %389 = vst.msk [vmem:[#allocation2] sm:$0x3] %vm388, %v387
        %p390 = scmp.eq.s32.totalorder %s26, 1
        %p391 = pnand %p278, %p390
        %p392 = pneg %p391
        // Predicated region
        $region53: #{tpu_custom_call.1} parent=35 // pred_check
          _
        $region54: #{tpu_custom_call.1} parent=35 // pred_check_branch
          %394 = sbr.rel (%p391) target = $region56
        $region55: #{tpu_custom_call.1} parent=35 // pred_region
          %v395 = vld [vmem:[#allocation7] sm:$0xff]
          %v396 = vld [vmem:[#allocation7 + $0x8] sm:$0x3]
          %v397 = vld [vmem:[%s3] sm:$0x1]
          %v398 = vld [vmem:[#allocation2] sm:$0x3]
          %v400 = vlaneseq
          %v401 = vshrl.u32 %v400, 7
          %v402 = vsub.s32 0, %v401
          %v403 = vrot.slane %v397, %v402
          %v405 = vadd.f32 %v398, %v403
          %v406 = vmax.f32 %v405, 0.0
          %407 = vrot.lane.b32.xlu0 %v403, 118
          %v408 = vpop.permute.xlu0 %407
          %vm410 = vcmask 80896
          %v412 = vsel %vm410, %v406, 0
          %vm414 = vcmask 1041408
          %v416 = vsel %vm414, %v396, 0
          %418 = vmatprep.subr.mxu0 0.0
          %419 = vmatpush1.msra.mxu0 %v395
          %420 = vmatprep.subr.mxu0 0.0
          %421 = vmatpush1.msra.mxu0 %v416
          %422 = vmatprep.subr.mxu0 0.0
          %423 = vmatpush1.msra.mxu0 0.0
          %424 = vmatprep.subr.mxu0 0.0
          %425 = vmatpush1.msra.mxu0 0.0
          %426 = vmatprep.subr.mxu0 0.0
          %427 = vmatpush1.msra.mxu0 0.0
          %428 = vmatprep.subr.mxu0 0.0
          %429 = vmatpush1.msra.mxu0 0.0
          %430 = vmatprep.subr.mxu0 0.0
          %431 = vmatpush1.msra.mxu0 0.0
          %432 = vmatprep.subr.mxu0 0.0
          %433 = vmatpush1.msra.mxu0 0.0
          %434 = vmatprep.subr.mxu0 0.0
          %435 = vmatpush1.msra.mxu0 0.0
          %436 = vmatprep.subr.mxu0 0.0
          %437 = vmatpush1.msra.mxu0 0.0
          %438 = vmatprep.subr.mxu0 0.0
          %439 = vmatpush1.msra.mxu0 0.0
          %440 = vmatprep.subr.mxu0 0.0
          %441 = vmatpush1.msra.mxu0 0.0
          %442 = vmatprep.subr.mxu0 0.0
          %443 = vmatpush1.msra.mxu0 0.0
          %444 = vmatprep.subr.mxu0 0.0
          %445 = vmatpush1.msra.mxu0 0.0
          %446 = vmatprep.subr.mxu0 0.0
          %447 = vmatpush1.msra.mxu0 0.0
          %448 = vmatprep.subr.mxu0 0.0
          %449 = vmatpush1.msra.mxu0 0.0
          %450 = vmatprep.subr.mxu0 0.0
          %451 = vmatpush1.msra.mxu0 0.0
          %452 = vmatprep.subr.mxu0 0.0
          %453 = vmatpush1.msra.mxu0 0.0
          %454 = vmatprep.subr.mxu0 0.0
          %455 = vmatpush1.msra.mxu0 0.0
          %456 = vmatprep.subr.mxu0 0.0
          %457 = vmatpush1.msra.mxu0 0.0
          %458 = vmatprep.subr.mxu0 0.0
          %459 = vmatpush1.msra.mxu0 0.0
          %460 = vmatprep.subr.mxu0 0.0
          %461 = vmatpush1.msra.mxu0 0.0
          %462 = vmatprep.subr.mxu0 0.0
          %463 = vmatpush1.msra.mxu0 0.0
          %464 = vmatprep.subr.mxu0 0.0
          %465 = vmatpush1.msra.mxu0 0.0
          %466 = vmatprep.subr.mxu0 0.0
          %467 = vmatpush1.msra.mxu0 0.0
          %468 = vmatprep.subr.mxu0 0.0
          %469 = vmatpush1.msra.mxu0 0.0
          %470 = vmatprep.subr.mxu0 0.0
          %471 = vmatpush1.msra.mxu0 0.0
          %472 = vmatprep.subr.mxu0 0.0
          %473 = vmatpush1.msra.mxu0 0.0
          %474 = vmatprep.subr.mxu0 0.0
          %475 = vmatpush1.msra.mxu0 0.0
          %476 = vmatprep.subr.mxu0 0.0
          %477 = vmatpush1.msra.mxu0 0.0
          %478 = vmatprep.subr.mxu0 0.0
          %479 = vmatpush1.msra.mxu0 0.0
          %480 = vmatprep.subr.mxu0 0.0
          %481 = vmatpush1.msra.mxu0 0.0
          %482 = vmatprep.mubr.f32.mxu0 0.0
          %483 = vmatmul.mubr.f32.gmra.mrb[0].mxu0 %v412
          %v484 = vpop.f32.mrb[0].mxu0
          %v485 = vadd.f32 %v408, %v484
          %v486 = vpop.f32.mrb[0].mxu0
          %487 = vdwg.mxu0
          %v488 = vxor.u32 %v485, 2147483648
          %v489 = vmul.f32 %v488, 1.442695
          %v490 = vpow.pop %v489
          %v491 = vadd.f32 %v490, 1.0
          %v492 = vrcp.pop %v491
          %v493 = vmul.f32 1.0, %v492
          %v494 = vtanh.pop %v485
          %496 = vrot.lane.b32.xlu0 %v494, 118
          %v497 = vpop.permute.xlu0 %496
          %v499 = vmul.f32 %v493, %v497
          %v500 = vtanh.pop %v499
          %502 = vrot.lane.b32.xlu0 %v500, 20
          %v503 = vpop.permute.xlu0 %502
          %v505 = vmul.f32 %v493, %v503
          %507 = vrot.lane.b32.xlu0 %v505, 108
          %v508 = vpop.permute.xlu0 %507
          %510 = vrot.lane.b32.xlu0 %v395, 98
          %v511 = vpop.permute.xlu0 %510
          %512 = vrot.lane.b32.xlu0 %v396, 98
          %v513 = vpop.permute.xlu0 %512
          %515 = vrot.lane.b32.xlu0 %v403, 88
          %v516 = vpop.permute.xlu0 %515
          %v518 = vsel %vm410, %v508, 0
          %v520 = vsel %vm414, %v513, 0
          %522 = vmatprep.subr.mxu0 0.0
          %523 = vmatpush1.msra.mxu0 %v511
          %524 = vmatprep.subr.mxu0 0.0
          %525 = vmatpush1.msra.mxu0 %v520
          %526 = vmatprep.subr.mxu0 0.0
          %527 = vmatpush1.msra.mxu0 0.0
          %528 = vmatprep.subr.mxu0 0.0
          %529 = vmatpush1.msra.mxu0 0.0
          %530 = vmatprep.subr.mxu0 0.0
          %531 = vmatpush1.msra.mxu0 0.0
          %532 = vmatprep.subr.mxu0 0.0
          %533 = vmatpush1.msra.mxu0 0.0
          %534 = vmatprep.subr.mxu0 0.0
          %535 = vmatpush1.msra.mxu0 0.0
          %536 = vmatprep.subr.mxu0 0.0
          %537 = vmatpush1.msra.mxu0 0.0
          %538 = vmatprep.subr.mxu0 0.0
          %539 = vmatpush1.msra.mxu0 0.0
          %540 = vmatprep.subr.mxu0 0.0
          %541 = vmatpush1.msra.mxu0 0.0
          %542 = vmatprep.subr.mxu0 0.0
          %543 = vmatpush1.msra.mxu0 0.0
          %544 = vmatprep.subr.mxu0 0.0
          %545 = vmatpush1.msra.mxu0 0.0
          %546 = vmatprep.subr.mxu0 0.0
          %547 = vmatpush1.msra.mxu0 0.0
          %548 = vmatprep.subr.mxu0 0.0
          %549 = vmatpush1.msra.mxu0 0.0
          %550 = vmatprep.subr.mxu0 0.0
          %551 = vmatpush1.msra.mxu0 0.0
          %552 = vmatprep.subr.mxu0 0.0
          %553 = vmatpush1.msra.mxu0 0.0
          %554 = vmatprep.subr.mxu0 0.0
          %555 = vmatpush1.msra.mxu0 0.0
          %556 = vmatprep.subr.mxu0 0.0
          %557 = vmatpush1.msra.mxu0 0.0
          %558 = vmatprep.subr.mxu0 0.0
          %559 = vmatpush1.msra.mxu0 0.0
          %560 = vmatprep.subr.mxu0 0.0
          %561 = vmatpush1.msra.mxu0 0.0
          %562 = vmatprep.subr.mxu0 0.0
          %563 = vmatpush1.msra.mxu0 0.0
          %564 = vmatprep.subr.mxu0 0.0
          %565 = vmatpush1.msra.mxu0 0.0
          %566 = vmatprep.subr.mxu0 0.0
          %567 = vmatpush1.msra.mxu0 0.0
          %568 = vmatprep.subr.mxu0 0.0
          %569 = vmatpush1.msra.mxu0 0.0
          %570 = vmatprep.subr.mxu0 0.0
          %571 = vmatpush1.msra.mxu0 0.0
          %572 = vmatprep.subr.mxu0 0.0
          %573 = vmatpush1.msra.mxu0 0.0
          %574 = vmatprep.subr.mxu0 0.0
          %575 = vmatpush1.msra.mxu0 0.0
          %576 = vmatprep.subr.mxu0 0.0
          %577 = vmatpush1.msra.mxu0 0.0
          %578 = vmatprep.subr.mxu0 0.0
          %579 = vmatpush1.msra.mxu0 0.0
          %580 = vmatprep.subr.mxu0 0.0
          %581 = vmatpush1.msra.mxu0 0.0
          %582 = vmatprep.subr.mxu0 0.0
          %583 = vmatpush1.msra.mxu0 0.0
          %584 = vmatprep.subr.mxu0 0.0
          %585 = vmatpush1.msra.mxu0 0.0
          %586 = vmatprep.mubr.f32.mxu0 0.0
          %587 = vmatmul.mubr.f32.gmra.mrb[0].mxu0 %v518
          %v588 = vpop.f32.mrb[0].mxu0
          %v589 = vadd.f32 %v516, %v588
          %v590 = vpop.f32.mrb[0].mxu0
          %591 = vdwg.mxu0
          %vm592 = vcmp.gt.f32.partialorder %v589, 0.0
          %v593 = vsel %vm592, 1, 0
          %v594 = vcvt.s32.f32 %v593
          %vm595 = vcmask 1024
          %596 = vst.msk [vmem:[%s277] sm:$0x3] %vm595, %v594
        $region56: #{tpu_custom_call.1} parent=35 // pred_fallthru
          _
        %p597 = scmp.lt.s32.totalorder %s24, 0
        %s598 = scalar_select %p597, %s24, 0
        %s599 = smul.addr %s598, 2
        %s600 = scalar_lea.vmem %s4, %s599
        // Predicated region
        $region57: #{tpu_custom_call.1} parent=35 // pred_check
          %p601 = pneg %p154
        $region58: #{tpu_custom_call.1} parent=35 // pred_check_branch
          %603 = sbr.rel (%p601) target = $region60
        $region59: #{tpu_custom_call.1} parent=35 // pred_region
          _
        $region60: #{tpu_custom_call.1} parent=35 // pred_fallthru
          _
        // Predicated region
        $region61: #{tpu_custom_call.1} parent=35 // pred_check
          %p604 = pneg %p154
        $region62: #{tpu_custom_call.1} parent=35 // pred_check_branch
          %606 = sbr.rel (%p604) target = $region64
        $region63: #{tpu_custom_call.1} parent=35 // pred_region
          %p607 = scmp.lt.s32.totalorder %s24, 0
          %s608 = scalar_select %p607, %s24, 0
          %s609 = smul.addr %s608, 2
          %s610 = scalar_lea.vmem %s4, %s609
        $region64: #{tpu_custom_call.1} parent=35 // pred_fallthru
          _
      $region36: #{tpu_custom_call.1} parent=5 // pred_fallthru
        _
      %p611 = scmp.le.s32.totalorder 2, %s14
      // Predicated region
      $region65: #{tpu_custom_call.1} parent=5 // pred_check
        %p612 = pneg %p611
      $region66: #{tpu_custom_call.1} parent=5 // pred_check_branch
        %614 = sbr.rel (%p612) target = $region68
      $region67: #{tpu_custom_call.1} parent=5 // pred_region
        %s615 = ssub.s32 %s14, 2
      $region68: #{tpu_custom_call.1} parent=5 // pred_fallthru
        _
    $region6: #{tpu_custom_call.1} parent=1 // loop_footer
      %s18 = sadd.s32 1, %s14
    $region7: #{tpu_custom_call.1} parent=1 // loop_footer_branch
      %13 = sbr.rel target = $region3
    $region8: #{tpu_custom_call.1} parent=1 // loop_exit
      _
    %616 = vsyncpa [#allocation4], 1
    %s617 = scalar_lea.sflag [#allocation4], 1
    %618 = vsyncpa %s617, 1
    %619 = vsyncpa [#allocation6], 1

</llo_original>
